<compile_context>
chip_gen: v5e
topology: v5e:2x2
jax: 0.10.0
libtpu: 0.0.40
codegen_flags: <defaults>
</compile_context>

<pallas_src>
import functools
import math

import jax
import jax.numpy as jnp
from jax import lax
from jax.experimental import pallas as pl
from jax.experimental.pallas import tpu as pltpu


def _exposure_loss_kernel(x_ref, sw_ref, out_ref, *, E, kH, kW, seg,
                          n_valid_groups, mask_tail):
    i = pl.program_id(0)

    x = x_ref[...]                              # (tr*kH, Wc), native dtype
    BR, Wc = x.shape
    tr = BR // kH                               # pooled row-groups in this block
    n_seg = Wc // seg

    # Height pooling first: kH contiguous input rows -> one pooled row.
    # Sublane group reduce with f32 accumulation; all downstream MXU/VPU work
    # shrinks by kH compared with pooling the width first.
    h = jnp.sum(x.reshape(tr, kH, Wc), axis=1, dtype=jnp.float32)   # (tr, Wc)

    # |window_mean - E| == |window_sum - E*kH*kW| / (kH*kW); the 1/(kH*kW)
    # scale is folded into a single division in the wrapper.
    c = jnp.float32(E * kH * kW)
    sw = sw_ref[...]                            # (seg, seg//kW) 0/1 block-sum matrix

    if mask_tail:
        # The ragged last block reads OOB-padded rows that may hold garbage/NaN.
        # jnp.where does NOT propagate NaN from the unselected branch, so
        # selecting (rather than multiplying by a mask) is safe.
        row = lax.broadcasted_iota(jnp.int32, (tr, 1), 0)
        valid = row < (n_valid_groups - i * tr)

    partial = jnp.float32(0.0)
    # Width pooling: apply the block-diagonal sum matrix one lane segment at a
    # time so MXU work stays linear in W.
    for s in range(n_seg):
        win = jnp.dot(h[:, s * seg:(s + 1) * seg], sw,
                      preferred_element_type=jnp.float32)            # (tr, seg//kW)
        contrib = jnp.abs(win - c)
        if mask_tail:
            contrib = jnp.where(valid, contrib, 0.0)
        partial = partial + jnp.sum(contrib)

    # Lane-dense, unmasked store of this block's partial; wrapper sums [:,0,0].
    out_ref[...] = jnp.broadcast_to(partial, out_ref.shape)


def _pick_segment(Wc, kW, max_lanes=256):
    """Largest multiple of kW that divides Wc and fits in max_lanes lanes."""
    best = kW
    s = kW
    limit = max(kW, max_lanes)
    while s <= min(Wc, limit):
        if Wc % s == 0:
            best = s
        s += kW
    # If Wc's divisor structure forces many tiny segments, fall back to one
    # dense matmul (still small after height pooling).
    if Wc // best > 8:
        best = Wc
    return best


def exposure_loss(img, E=0.6, kernel_size=(8, 8)):
    """Pallas equivalent of ExposureLoss.forward for an NCHW image."""
    kH, kW = kernel_size
    B, C, H, W = img.shape
    Ho, Wo = H // kH, W // kW
    assert Ho > 0 and Wo > 0, "image smaller than the pooling kernel"
    Hc, Wc = Ho * kH, Wo * kW
    # avg_pool2d (stride == kernel_size, no padding) ignores remainder
    # rows/cols -> crop them (no-op when divisible).
    if (Hc, Wc) != (H, W):
        img = img[:, :, :Hc, :Wc]

    N = B * C
    x2d = img.reshape(N * Hc, Wc)               # contiguous 2-D slab
    G = N * Ho                                  # total pooled row-groups

    # Generation-aware tile sizing + explicit scoped-VMEM limit.
    try:
        vmem_bytes = int(pltpu.get_tpu_info().vmem_capacity_bytes)
    except Exception:                           # conservative (v7x-sized) fallback
        vmem_bytes = 64 * 1024 * 1024
    per_buf_target = min(16 * 1024 * 1024, vmem_bytes // 8)
    vmem_limit = int(vmem_bytes * 3 // 4)

    itemsize = jnp.dtype(img.dtype).itemsize
    sublane = max(8, 32 // itemsize)            # 8 for f32, 16 for bf16
    group_bytes = kH * Wc * itemsize            # one pooled row-group of input
    tr = max(1, per_buf_target // group_bytes)  # pooled row-groups per block
    tr = min(tr, G)
    if tr < G:
        # Block's second-to-last dim (tr*kH) must be a multiple of the sublane tile.
        mult = sublane // math.gcd(kH, sublane)
        tr = max(mult, (tr // mult) * mult)
        tr = min(tr, G)
    grid = pl.cdiv(G, tr)
    block_rows = tr * kH

    # 0/1 block-sum matrix for one lane segment of the width pooling
    # (built once here; resident in VMEM via a constant index_map).
    seg = _pick_segment(Wc, kW)
    s_w = (jnp.arange(seg)[:, None] // kW
           == jnp.arange(seg // kW)[None, :]).astype(jnp.float32)

    kernel = functools.partial(
        _exposure_loss_kernel, E=float(E), kH=kH, kW=kW, seg=seg,
        n_valid_groups=G, mask_tail=(G % tr != 0))

    partials = pl.pallas_call(
        kernel,
        out_shape=jax.ShapeDtypeStruct((grid, 8, 128), jnp.float32),
        grid_spec=pltpu.PrefetchScalarGridSpec(
            num_scalar_prefetch=0,
            grid=(grid,),
            in_specs=[
                pl.BlockSpec((block_rows, Wc), lambda i: (i, 0)),
                pl.BlockSpec((seg, seg // kW), lambda i: (0, 0)),   # resident constant
            ],
            out_specs=pl.BlockSpec((1, 8, 128), lambda i: (i, 0, 0)),
        ),
        compiler_params=pltpu.CompilerParams(
            dimension_semantics=("parallel",),
            vmem_limit_bytes=vmem_limit,
        ),
    )(x2d, s_w)

    total = jnp.sum(partials[:, 0, 0])
    count = N * Ho * Wo                          # number of pooled windows
    return total / jnp.float32(kH * kW * count)


def _exposure_loss_ref(img, E=0.6, kernel_size=(8, 8)):
    """Plain-JAX reference (matches F.avg_pool2d + |.-E|.mean())."""
    kH, kW = kernel_size
    B, C, H, W = img.shape
    Ho, Wo = H // kH, W // kW
    x = img[:, :, :Ho * kH, :Wo * kW]
    pooled = x.reshape(B, C, Ho, kH, Wo, kW).mean(axis=(3, 5))
    return jnp.mean(jnp.abs(pooled - E))


if __name__ == "__main__":
    key = jax.random.PRNGKey(0)
    B, C, H, W = 2, 4, 16, 16
    img = jax.random.uniform(key, (B, C, H, W), dtype=jnp.float32)

    out = exposure_loss(img, E=0.6, kernel_size=(8, 8))
    jax.block_until_ready(out)
    ref = _exposure_loss_ref(img, E=0.6, kernel_size=(8, 8))
    assert jnp.allclose(out, ref, rtol=1e-5, atol=1e-6), (out, ref)

    # Non-divisible spatial dims exercise the avg_pool2d-style cropping.
    img2 = jax.random.uniform(jax.random.PRNGKey(1), (2, 3, 20, 28),
                              dtype=jnp.float32)
    out2 = exposure_loss(img2, E=0.6, kernel_size=(8, 8))
    jax.block_until_ready(out2)
    ref2 = _exposure_loss_ref(img2, E=0.6, kernel_size=(8, 8))
    assert jnp.allclose(out2, ref2, rtol=1e-5, atol=1e-6), (out2, ref2)

    print("KERNEL_OK")
</pallas_src>

<mosaic_0001>
module attributes {stable_mosaic.version = 11 : i64} {
  func.func @_exposure_loss_kernel(%arg0: i32, %arg1: memref<128x16xf32, #tpu.memory_space<vmem>>, %arg2: memref<16x2xf32, #tpu.memory_space<vmem>>, %arg3: memref<1x8x128xf32, #tpu.memory_space<vmem>>) attributes {dimension_semantics = [#tpu.dimension_semantics<parallel>], iteration_bounds = array<i64: 1>, scalar_prefetch = 0 : i64, scratch_operands = 0 : i64, tpu.core_type = #tpu.core_type<tc>, window_params = [{transform_indices = @transform_0, window_bounds = array<i64: 128, 16>}, {pipeline_mode = #tpu.pipeline_mode<synchronous>, transform_indices = @transform_1, window_bounds = array<i64: 16, 2>}, {transform_indices = @transform_2, window_bounds = array<i64: 1, 8, 128>}]} {
    %c0 = arith.constant 0 : index
    %c0_0 = arith.constant 0 : index
    %0 = vector.load %arg1[%c0, %c0_0] : memref<128x16xf32, #tpu.memory_space<vmem>>, vector<128x16xf32>
    %1 = vector.shape_cast %0 : vector<128x16xf32> to vector<16x8x16xf32>
    %cst = arith.constant dense<0.000000e+00> : vector<16x16xf32>
    %2 = vector.multi_reduction <add>, %1, %cst [1] : vector<16x8x16xf32> to vector<16x16xf32>
    %c0_1 = arith.constant 0 : index
    %c0_2 = arith.constant 0 : index
    %3 = vector.load %arg2[%c0_1, %c0_2] : memref<16x2xf32, #tpu.memory_space<vmem>>, vector<16x2xf32>
    %cst_3 = arith.constant dense<0.000000e+00> : vector<16x2xf32>
    %4 = tpu.matmul %2, %3, %cst_3 {dimension_numbers = #tpu.dot_dimension_numbers<[1], [0], [0], [1], [0, 0, 1, 1], [], []>} : vector<16x16xf32>, vector<16x2xf32>, vector<16x2xf32> -> vector<16x2xf32>
    %cst_4 = arith.constant 3.840000e+01 : f32
    %5 = vector.broadcast %cst_4 : f32 to vector<16x2xf32>
    %6 = arith.subf %4, %5 : vector<16x2xf32>
    %7 = math.absf %6 : vector<16x2xf32>
    %8 = vector.shape_cast %7 : vector<16x2xf32> to vector<1x16x2xf32>
    %cst_5 = arith.constant dense<0.000000e+00> : vector<1xf32>
    %9 = vector.multi_reduction <add>, %8, %cst_5 [1, 2] : vector<1x16x2xf32> to vector<1xf32>
    %10 = vector.shape_cast %9 : vector<1xf32> to vector<1x1x1xf32>
    %11 = vector.extract %10[0, 0, 0] : f32 from vector<1x1x1xf32>
    %cst_6 = arith.constant 0.000000e+00 : f32
    %12 = arith.addf %cst_6, %11 : f32
    %13 = vector.broadcast %12 : f32 to vector<1x8x128xf32>
    %c0_7 = arith.constant 0 : index
    %c0_8 = arith.constant 0 : index
    %c0_9 = arith.constant 0 : index
    %14 = vector.load %arg3[%c0_7, %c0_8, %c0_9] : memref<1x8x128xf32, #tpu.memory_space<vmem>>, vector<1x8x128xf32>
    tpu.vector_store %arg3[%c0_7, %c0_8, %c0_9], %13 {strides = array<i32>} : memref<1x8x128xf32, #tpu.memory_space<vmem>>, vector<1x8x128xf32>,
    return
  }
  func.func @transform_0(%arg0: i32) -> (i32, i32) {
    %c0_i32 = arith.constant 0 : i32
    %c0_i32_0 = arith.constant 0 : i32
    return %arg0, %c0_i32 : i32, i32
  }
  func.func @transform_1(%arg0: i32) -> (i32, i32) {
    %c0_i32 = arith.constant 0 : i32
    %c0_i32_0 = arith.constant 0 : i32
    %c0_i32_1 = arith.constant 0 : i32
    return %c0_i32, %c0_i32_0 : i32, i32
  }
  func.func @transform_2(%arg0: i32) -> (i32, i32, i32) {
    %c0_i32 = arith.constant 0 : i32
    %c0_i32_0 = arith.constant 0 : i32
    %c0_i32_1 = arith.constant 0 : i32
    return %arg0, %c0_i32, %c0_i32_0 : i32, i32, i32
  }
}

</mosaic_0001>

<llo_original>
// kernel: tpu_custom_call.1
$region0: #{tpu_custom_call.1}
  #allocation0 [shape = 'u32[]', space=smem, size = 0x4, offset = 0x4, fixed_abs, tag = 'smem constant byte address 0x4 - core index']
  #allocation1 [shape = 'u32[72,128]{1,0:T(1,128)}', space=vmem, size = 0x9000, scoped, tag = 'internal scratch']
  %s0 = inlined_call_operand.vmem [shape: f32[128,16], index: 0, kind: input, shape index: {}]
  %s1 = inlined_call_operand.vmem [shape: f32[16,2], index: 1, kind: input, shape index: {}]
  %s2 = inlined_call_operand.hbm [shape: f32[1,8,128], index: 2, kind: output, shape index: {}]
  %s3 = sld [smem:[#allocation0]]
  $region18: #{tpu_custom_call.1} parent=0
    _
  %s5 = ssub.s32 1, %s3
  %s6 = scalar_select 0, %s5, %s3
  $region1: #{tpu_custom_call.1} parent=0
    #allocation2 [shape = 'u8[4096]{0}', space=vmem, size = 0x1000, scoped, tag = 'output window, operand 0, single buffered']
    #allocation3 [shape = 's32[1]{0}', space=sflag, size = 0x4, scoped, tag = 'scoped memory for tpu_custom_call.1']
    %7 = vsyncpa [#allocation3], 0
    // Predicated region
    $region2: #{tpu_custom_call.1} parent=1 // pred_check
      _
    $region3: #{tpu_custom_call.1} parent=1 // pred_check_branch
      %9 = sbr.rel (0) target = $region5
    $region4: #{tpu_custom_call.1} parent=1 // pred_region
      _
    $region5: #{tpu_custom_call.1} parent=1 // pred_fallthru
      _
    // Predicated region
    $region6: #{tpu_custom_call.1} parent=1 // pred_check
      _
    $region7: #{tpu_custom_call.1} parent=1 // pred_check_branch
      %11 = sbr.rel (0) target = $region9
    $region8: #{tpu_custom_call.1} parent=1 // pred_region
      _
    $region9: #{tpu_custom_call.1} parent=1 // pred_fallthru
      _
    %v12 = vld [vmem:[%s0] sm:$0xff]
    %v13 = vld [vmem:[%s0 + $0x8] sm:$0xff]
    %v14 = vld [vmem:[%s0 + $0x10] sm:$0xff]
    %v15 = vld [vmem:[%s0 + $0x18] sm:$0xff]
    %v16 = vld [vmem:[%s0 + $0x20] sm:$0xff]
    %v17 = vld [vmem:[%s0 + $0x28] sm:$0xff]
    %v18 = vld [vmem:[%s0 + $0x30] sm:$0xff]
    %v19 = vld [vmem:[%s0 + $0x38] sm:$0xff]
    %v20 = vld [vmem:[%s0 + $0x40] sm:$0xff]
    %v21 = vld [vmem:[%s0 + $0x48] sm:$0xff]
    %v22 = vld [vmem:[%s0 + $0x50] sm:$0xff]
    %v23 = vld [vmem:[%s0 + $0x58] sm:$0xff]
    %v24 = vld [vmem:[%s0 + $0x60] sm:$0xff]
    %v25 = vld [vmem:[%s0 + $0x68] sm:$0xff]
    %v26 = vld [vmem:[%s0 + $0x70] sm:$0xff]
    %v27 = vld [vmem:[%s0 + $0x78] sm:$0xff]
    %vm28 = vcmask 130048
    %v29 = vsel %vm28, %v12, 0.0
    %v30 = vrot.slane %v29, 4
    %v31 = vadd.f32 %v29, %v30
    %v32 = vrot.slane %v31, 2
    %v33 = vadd.f32 %v31, %v32
    %v34 = vrot.slane %v33, 1
    %v35 = vadd.f32 %v33, %v34
    %v36 = vsel %vm28, %v13, 0.0
    %v37 = vrot.slane %v36, 4
    %v38 = vadd.f32 %v36, %v37
    %v39 = vrot.slane %v38, 2
    %v40 = vadd.f32 %v38, %v39
    %v41 = vrot.slane %v40, 1
    %v42 = vadd.f32 %v40, %v41
    %v43 = vsel %vm28, %v14, 0.0
    %v44 = vrot.slane %v43, 4
    %v45 = vadd.f32 %v43, %v44
    %v46 = vrot.slane %v45, 2
    %v47 = vadd.f32 %v45, %v46
    %v48 = vrot.slane %v47, 1
    %v49 = vadd.f32 %v47, %v48
    %v50 = vsel %vm28, %v15, 0.0
    %v51 = vrot.slane %v50, 4
    %v52 = vadd.f32 %v50, %v51
    %v53 = vrot.slane %v52, 2
    %v54 = vadd.f32 %v52, %v53
    %v55 = vrot.slane %v54, 1
    %v56 = vadd.f32 %v54, %v55
    %v57 = vsel %vm28, %v16, 0.0
    %v58 = vrot.slane %v57, 4
    %v59 = vadd.f32 %v57, %v58
    %v60 = vrot.slane %v59, 2
    %v61 = vadd.f32 %v59, %v60
    %v62 = vrot.slane %v61, 1
    %v63 = vadd.f32 %v61, %v62
    %v64 = vsel %vm28, %v17, 0.0
    %v65 = vrot.slane %v64, 4
    %v66 = vadd.f32 %v64, %v65
    %v67 = vrot.slane %v66, 2
    %v68 = vadd.f32 %v66, %v67
    %v69 = vrot.slane %v68, 1
    %v70 = vadd.f32 %v68, %v69
    %v71 = vsel %vm28, %v18, 0.0
    %v72 = vrot.slane %v71, 4
    %v73 = vadd.f32 %v71, %v72
    %v74 = vrot.slane %v73, 2
    %v75 = vadd.f32 %v73, %v74
    %v76 = vrot.slane %v75, 1
    %v77 = vadd.f32 %v75, %v76
    %v78 = vsel %vm28, %v19, 0.0
    %v79 = vrot.slane %v78, 4
    %v80 = vadd.f32 %v78, %v79
    %v81 = vrot.slane %v80, 2
    %v82 = vadd.f32 %v80, %v81
    %v83 = vrot.slane %v82, 1
    %v84 = vadd.f32 %v82, %v83
    %v85 = vsel %vm28, %v20, 0.0
    %v86 = vrot.slane %v85, 4
    %v87 = vadd.f32 %v85, %v86
    %v88 = vrot.slane %v87, 2
    %v89 = vadd.f32 %v87, %v88
    %v90 = vrot.slane %v89, 1
    %v91 = vadd.f32 %v89, %v90
    %v92 = vsel %vm28, %v21, 0.0
    %v93 = vrot.slane %v92, 4
    %v94 = vadd.f32 %v92, %v93
    %v95 = vrot.slane %v94, 2
    %v96 = vadd.f32 %v94, %v95
    %v97 = vrot.slane %v96, 1
    %v98 = vadd.f32 %v96, %v97
    %v99 = vsel %vm28, %v22, 0.0
    %v100 = vrot.slane %v99, 4
    %v101 = vadd.f32 %v99, %v100
    %v102 = vrot.slane %v101, 2
    %v103 = vadd.f32 %v101, %v102
    %v104 = vrot.slane %v103, 1
    %v105 = vadd.f32 %v103, %v104
    %v106 = vsel %vm28, %v23, 0.0
    %v107 = vrot.slane %v106, 4
    %v108 = vadd.f32 %v106, %v107
    %v109 = vrot.slane %v108, 2
    %v110 = vadd.f32 %v108, %v109
    %v111 = vrot.slane %v110, 1
    %v112 = vadd.f32 %v110, %v111
    %v113 = vsel %vm28, %v24, 0.0
    %v114 = vrot.slane %v113, 4
    %v115 = vadd.f32 %v113, %v114
    %v116 = vrot.slane %v115, 2
    %v117 = vadd.f32 %v115, %v116
    %v118 = vrot.slane %v117, 1
    %v119 = vadd.f32 %v117, %v118
    %v120 = vsel %vm28, %v25, 0.0
    %v121 = vrot.slane %v120, 4
    %v122 = vadd.f32 %v120, %v121
    %v123 = vrot.slane %v122, 2
    %v124 = vadd.f32 %v122, %v123
    %v125 = vrot.slane %v124, 1
    %v126 = vadd.f32 %v124, %v125
    %v127 = vsel %vm28, %v26, 0.0
    %v128 = vrot.slane %v127, 4
    %v129 = vadd.f32 %v127, %v128
    %v130 = vrot.slane %v129, 2
    %v131 = vadd.f32 %v129, %v130
    %v132 = vrot.slane %v131, 1
    %v133 = vadd.f32 %v131, %v132
    %v134 = vsel %vm28, %v27, 0.0
    %v135 = vrot.slane %v134, 4
    %v136 = vadd.f32 %v134, %v135
    %v137 = vrot.slane %v136, 2
    %v138 = vadd.f32 %v136, %v137
    %v139 = vrot.slane %v138, 1
    %v140 = vadd.f32 %v138, %v139
    %v141 = vld [vmem:[%s1] sm:$0xff]
    %v142 = vld [vmem:[%s1 + $0x8] sm:$0xff]
    %vm159 = vcmask 1041409
    %v160 = vsel %vm159, %v42, %v35
    %vm161 = vcmask 1042434
    %v162 = vsel %vm161, %v49, %v160
    %vm163 = vcmask 1043459
    %v164 = vsel %vm163, %v56, %v162
    %vm165 = vcmask 1044484
    %v166 = vsel %vm165, %v63, %v164
    %vm167 = vcmask 1045509
    %v168 = vsel %vm167, %v70, %v166
    %vm169 = vcmask 1046534
    %v170 = vsel %vm169, %v77, %v168
    %vm171 = vcmask 1047559
    %v172 = vsel %vm171, %v84, %v170
    %v173 = vsel %vm159, %v98, %v91
    %v174 = vsel %vm161, %v105, %v173
    %v175 = vsel %vm163, %v112, %v174
    %v176 = vsel %vm165, %v119, %v175
    %v177 = vsel %vm167, %v126, %v176
    %v178 = vsel %vm169, %v133, %v177
    %v179 = vsel %vm171, %v140, %v178
    %v180 = vsel %vm28, %v172, 0
    %v182 = vsel %vm28, %v179, 0
    %184 = vmatpush.msra.mxu0 0.0
    %185 = vmatpush.msra.mxu0 0.0
    %186 = vmatpush.msra.mxu0 0.0
    %187 = vmatpush.msra.mxu0 0.0
    %188 = vmatpush.msra.mxu0 0.0
    %189 = vmatpush.msra.mxu0 0.0
    %190 = vmatpush.msra.mxu0 0.0
    %191 = vmatpush.msra.mxu0 0.0
    %192 = vmatpush.msra.mxu0 0.0
    %193 = vmatpush.msra.mxu0 0.0
    %194 = vmatpush.msra.mxu0 0.0
    %195 = vmatpush.msra.mxu0 0.0
    %196 = vmatpush.msra.mxu0 0.0
    %197 = vmatpush.msra.mxu0 0.0
    %198 = vmatpush.msra.mxu0 %v142
    %199 = vmatpush.msra.mxu0 %v141
    %200 = vmatmul.f32.gmra.mxu0 %v180
    %v201 = vpop.f32.mrf.mxu0
    %v202 = vadd.f32 0.0, %v201
    %203 = vmatmul.f32.gmra.mxu0 %v182
    %v204 = vpop.f32.mrf.mxu0
    %v205 = vadd.f32 0.0, %v204
    %206 = vdwg.mxu0
    %v207 = vsub.f32 %v202, 38.4
    %v208 = vsub.f32 %v205, 38.4
    %v209 = vand.u32 2147483647, %v207
    %v210 = vand.u32 2147483647, %v208
    %vm211 = vcmask 15360
    %v212 = vsel %vm211, %v209, 0.0
    %v213 = vsel %vm211, %v210, 0.0
    %v214 = vadd.f32 %v212, %v213
    %215 = vadd.xlane.f32.xlu0 %v214
    %v216 = vpop.xlane.xlu0 %215
    %v217 = vrot.slane %v216, 4
    %v218 = vadd.f32 %v216, %v217
    %v219 = vrot.slane %v218, 2
    %v220 = vadd.f32 %v218, %v219
    %v221 = vrot.slane %v220, 1
    %v222 = vadd.f32 %v220, %v221
    %s223 = vtos %v222
    %s224 = sadd.f32 %s223, 0.0
    %v225 = vstv %s224
    %226 = vst [vmem:[#allocation2] sm:$0xff] %v225
    // Predicated region
    $region10: #{tpu_custom_call.1} parent=1 // pred_check
      _
    $region11: #{tpu_custom_call.1} parent=1 // pred_check_branch
      %228 = sbr.rel (0) target = $region13
    $region12: #{tpu_custom_call.1} parent=1 // pred_region
      %230 = vsyncadd [#allocation3], 0
      %s232 = sshll.u32 [#allocation2], 4
      %s233 = int_to_ptr.vmem [resolvable:$true] %s232
      %s234 = sshll.u32 %s2, 4
      %s235 = int_to_ptr.hbm [resolvable:$true] %s234
      %237 = dma.vmem_to_hbm [thread:$0]  %s233, 128, %s235, [#allocation3]
    $region13: #{tpu_custom_call.1} parent=1 // pred_fallthru
      _
    // Predicated region
    $region14: #{tpu_custom_call.1} parent=1 // pred_check
      _
    $region15: #{tpu_custom_call.1} parent=1 // pred_check_branch
      %239 = sbr.rel (0) target = $region17
    $region16: #{tpu_custom_call.1} parent=1 // pred_region
      %241 = dma.done [#allocation3], 128
    $region17: #{tpu_custom_call.1} parent=1 // pred_fallthru
      _
    %242 = vsyncpa [#allocation3], 1

</llo_original>
